<compile_context>
chip_gen: v7x
topology: tpu7x:2x2x1
jax: 0.10.0
libtpu: 0.0.40
codegen_flags: <defaults>
</compile_context>

<pallas_src>
import functools

import jax
import jax.numpy as jnp
from jax.experimental import pallas as pl
from jax.experimental.pallas import tpu as pltpu


def _round_up(n, m):
    return (n + m - 1) // m * m


# ---------------------------------------------------------------------------
# Kernel: full 5-layer forward pass on one batch tile. Params are resident.
# layer_meta is a static tuple of (row_offset, rows_used, cpad) per layer.
# ---------------------------------------------------------------------------
def deep_model_kernel(x_ref, w_ref, b_ref, o_ref, *, layer_meta, out_dim,
                      compute_dtype):
    num_layers = len(layer_meta)
    h = x_ref[...].astype(compute_dtype)            # (tile_b, input_size)
    for l, (row_off, rows_used, cpad) in enumerate(layer_meta):
        # Static, tile-aligned slice of the packed weight slab (free view).
        w = w_ref[row_off:row_off + rows_used, :cpad]
        a = jnp.dot(h, w, preferred_element_type=jnp.float32)   # MXU, f32 acc
        a = a + b_ref[l, :, :cpad]                   # f32 bias, broadcast rows
        a = jnp.maximum(a, 0.01 * a)                 # leaky_relu (VPU mul+max)
        # Keep inter-layer activations in the compute dtype (bf16 path halves
        # the live activation footprint); keep the final layer in f32.
        h = a if l == num_layers - 1 else a.astype(compute_dtype)
    o_ref[...] = h[:, :out_dim].astype(o_ref.dtype)  # narrow (tile_b, 1) store


# ---------------------------------------------------------------------------
# Parameter construction (mirrors the PyTorch module's layer shapes).
# Weights are stored pre-transposed as [in, out] so the kernel computes x @ W.
# ---------------------------------------------------------------------------
def init_params(input_size, key):
    d1 = input_size * 2
    d2 = round(input_size * 1.5)
    d3 = round(input_size * 0.5)
    dims = [(input_size, d1), (d1, d2), (d2, d3), (d3, 20), (20, 1)]

    params = []
    for (din, dout) in dims:
        key, kw, kb = jax.random.split(key, 3)
        w = jax.random.uniform(kw, (din, dout), jnp.float32, -0.1, 0.1)
        b = jax.random.uniform(kb, (1, dout), jnp.float32, -0.1, 0.1)
        params.append((w, b))
    return params


def pack_params(params, param_dtype=jnp.bfloat16, lane_pad=128):
    """Pack all layers row-wise into one zero-padded weight slab + bias slab.

    Layer l occupies rows [row_off_l, row_off_l + roundup(din_l, lane_pad)) of
    the slab; only the first din_l rows / dout_l cols are nonzero.
    (If hidden dims ever grow past 128, lane_pad=256 is optimal on v6e/v7x.)
    """
    num_layers = len(params)
    cpads = [_round_up(w.shape[1], lane_pad) for (w, _) in params]
    rpads = [_round_up(w.shape[0], lane_pad) for (w, _) in params]
    cmax = max(cpads)

    row_offs, off = [], 0
    for r in rpads:
        row_offs.append(off)
        off += r
    total_rows = off

    w_slab = jnp.zeros((total_rows, cmax), param_dtype)
    b_slab = jnp.zeros((num_layers, 1, cmax), jnp.float32)
    for l, (w, b) in enumerate(params):
        din, dout = w.shape
        w_slab = w_slab.at[row_offs[l]:row_offs[l] + din, :dout].set(
            w.astype(param_dtype))
        b_slab = b_slab.at[l, 0, :dout].set(b.reshape(-1).astype(jnp.float32))

    layer_meta = []
    for l, (w, _) in enumerate(params):
        din = w.shape[0]
        # Layer 0 contracts against the unpadded x width; later layers contract
        # over the previous layer's padded width (extra rows are zero).
        rows_used = din if l == 0 else cpads[l - 1]
        layer_meta.append((row_offs[l], rows_used, cpads[l]))
    return w_slab, b_slab, tuple(layer_meta)


# ---------------------------------------------------------------------------
# Wrapper: tile over batch, single pallas_call, resident params.
# ---------------------------------------------------------------------------
def deep_model_forward(x, params, *, param_dtype=jnp.bfloat16, tile_b=2048):
    batch, input_size = x.shape
    num_layers = len(params)
    out_dim = params[-1][0].shape[1]
    assert params[0][0].shape[0] == input_size

    w_slab, b_slab, layer_meta = pack_params(params, param_dtype)
    total_rows, cmax = w_slab.shape

    # Batch tiling: big tiles amortize per-step overhead; if the whole (large)
    # batch fits in one requested tile, split it so v7x's 2nd TC gets work.
    tile_b = max(8, int(tile_b))
    if batch <= tile_b:
        if batch >= 1024:
            tile_b = _round_up((batch + 1) // 2, 8)
        else:
            tile_b = _round_up(batch, 8)
    batch_pad = _round_up(batch, tile_b)
    if batch_pad != batch:
        x = jnp.pad(x, ((0, batch_pad - batch), (0, 0)))  # batch-dim pad only

    grid = (batch_pad // tile_b,)
    kernel = functools.partial(deep_model_kernel, layer_meta=layer_meta,
                               out_dim=out_dim, compute_dtype=w_slab.dtype)

    out = pl.pallas_call(
        kernel,
        out_shape=jax.ShapeDtypeStruct((batch_pad, out_dim), jnp.float32),
        grid=grid,
        in_specs=[
            # activation tile: streams over the batch grid axis, unpadded width
            pl.BlockSpec((tile_b, input_size), lambda i: (i, 0)),
            # packed weights / biases: resident (same block every grid step)
            pl.BlockSpec((total_rows, cmax), lambda i: (0, 0)),
            pl.BlockSpec((num_layers, 1, cmax), lambda i: (0, 0, 0)),
        ],
        out_specs=pl.BlockSpec((tile_b, out_dim), lambda i: (i, 0)),
        compiler_params=pltpu.CompilerParams(
            dimension_semantics=("parallel",)),   # megacore sharding on v7x
    )(x, w_slab, b_slab)

    return out[:batch]


# ---------------------------------------------------------------------------
# Pure-JAX reference (PyTorch semantics: x @ W.T + b == x @ w_stored + b).
# ---------------------------------------------------------------------------
def reference_forward(x, params):
    h = x
    for (w, b) in params:
        h = h @ w + b
        h = jnp.where(h > 0, h, 0.01 * h)
    return h


if __name__ == "__main__":
    key = jax.random.PRNGKey(0)
    k_x, k_p, k_x2 = jax.random.split(key, 3)

    input_size = 32
    params = init_params(input_size, k_p)

    # Small batch. Default path: bf16 weights/activations, f32 accumulate.
    x = jax.random.normal(k_x, (8, input_size), jnp.float32)
    ref = reference_forward(x, params)
    out = jax.block_until_ready(deep_model_forward(x, params))
    assert out.shape == (8, 1)
    assert jnp.allclose(out, ref, atol=1e-2, rtol=1e-1)

    # f32-weight path (bit-faithful check).
    out_f32 = jax.block_until_ready(
        deep_model_forward(x, params, param_dtype=jnp.float32))
    assert out_f32.shape == (8, 1)
    assert jnp.allclose(out_f32, ref, atol=1e-5, rtol=1e-5)

    # Larger, non-multiple batch: exercises batch tiling, batch padding and the
    # multi-step parallel grid axis (second TensorCore on v7x).
    xl = jax.random.normal(k_x2, (1000, input_size), jnp.float32)
    refl = reference_forward(xl, params)
    outl = jax.block_until_ready(
        deep_model_forward(xl, params, param_dtype=jnp.float32, tile_b=256))
    assert outl.shape == (1000, 1)
    assert jnp.allclose(outl, refl, atol=1e-5, rtol=1e-5)

    outl_bf16 = jax.block_until_ready(deep_model_forward(xl, params, tile_b=256))
    assert outl_bf16.shape == (1000, 1)
    assert jnp.allclose(outl_bf16, refl, atol=1e-2, rtol=1e-1)

    print("KERNEL_OK")
</pallas_src>

<mosaic_0001>
module attributes {stable_mosaic.version = 11 : i64} {
  func.func @deep_model_kernel(%arg0: i32, %arg1: memref<8x32xf32, #tpu.memory_space<vmem>>, %arg2: memref<640x128xbf16, #tpu.memory_space<vmem>>, %arg3: memref<5x1x128xf32, #tpu.memory_space<vmem>>, %arg4: memref<8x1xf32, #tpu.memory_space<vmem>>) attributes {dimension_semantics = [#tpu.dimension_semantics<parallel>], iteration_bounds = array<i64: 1>, scalar_prefetch = 0 : i64, scratch_operands = 0 : i64, tpu.core_type = #tpu.core_type<tc>, window_params = [{transform_indices = @transform_0, window_bounds = array<i64: 8, 32>}, {pipeline_mode = #tpu.pipeline_mode<synchronous>, transform_indices = @transform_1, window_bounds = array<i64: 640, 128>}, {pipeline_mode = #tpu.pipeline_mode<synchronous>, transform_indices = @transform_2, window_bounds = array<i64: 5, 1, 128>}, {transform_indices = @transform_3, window_bounds = array<i64: 8, 1>}]} {
    %c0 = arith.constant 0 : index
    %c0_0 = arith.constant 0 : index
    %0 = vector.load %arg1[%c0, %c0_0] : memref<8x32xf32, #tpu.memory_space<vmem>>, vector<8x32xf32>
    %1 = arith.truncf %0 : vector<8x32xf32> to vector<8x32xbf16>
    %c0_1 = arith.constant 0 : index
    %c0_2 = arith.constant 0 : index
    %2 = vector.load %arg2[%c0_1, %c0_2] : memref<640x128xbf16, #tpu.memory_space<vmem>>, vector<32x128xbf16>
    %cst = arith.constant dense<0.000000e+00> : vector<8x128xf32>
    %3 = tpu.matmul %1, %2, %cst {dimension_numbers = #tpu.dot_dimension_numbers<[1], [0], [0], [1], [0, 0, 1, 1], [], []>} : vector<8x32xbf16>, vector<32x128xbf16>, vector<8x128xf32> -> vector<8x128xf32>
    %c0_3 = arith.constant 0 : index
    %c0_4 = arith.constant 0 : index
    %c0_5 = arith.constant 0 : index
    %4 = vector.load %arg3[%c0_3, %c0_4, %c0_5] : memref<5x1x128xf32, #tpu.memory_space<vmem>>, vector<1x1x128xf32>
    %5 = vector.shape_cast %4 : vector<1x1x128xf32> to vector<1x128xf32>
    %6 = vector.broadcast %5 : vector<1x128xf32> to vector<8x128xf32>
    %7 = arith.addf %3, %6 : vector<8x128xf32>
    %cst_6 = arith.constant 0.00999999977 : f32
    %8 = vector.broadcast %cst_6 : f32 to vector<8x128xf32>
    %9 = arith.mulf %8, %7 : vector<8x128xf32>
    %10 = arith.maximumf %7, %9 : vector<8x128xf32>
    %11 = arith.truncf %10 : vector<8x128xf32> to vector<8x128xbf16>
    %c128 = arith.constant 128 : index
    %c0_7 = arith.constant 0 : index
    %12 = vector.load %arg2[%c128, %c0_7] : memref<640x128xbf16, #tpu.memory_space<vmem>>, vector<128x128xbf16>
    %cst_8 = arith.constant dense<0.000000e+00> : vector<8x128xf32>
    %13 = tpu.matmul %11, %12, %cst_8 {dimension_numbers = #tpu.dot_dimension_numbers<[1], [0], [0], [1], [0, 0, 1, 1], [], []>} : vector<8x128xbf16>, vector<128x128xbf16>, vector<8x128xf32> -> vector<8x128xf32>
    %c1 = arith.constant 1 : index
    %c0_9 = arith.constant 0 : index
    %c0_10 = arith.constant 0 : index
    %14 = vector.load %arg3[%c1, %c0_9, %c0_10] : memref<5x1x128xf32, #tpu.memory_space<vmem>>, vector<1x1x128xf32>
    %15 = vector.shape_cast %14 : vector<1x1x128xf32> to vector<1x128xf32>
    %16 = vector.broadcast %15 : vector<1x128xf32> to vector<8x128xf32>
    %17 = arith.addf %13, %16 : vector<8x128xf32>
    %cst_11 = arith.constant 0.00999999977 : f32
    %18 = vector.broadcast %cst_11 : f32 to vector<8x128xf32>
    %19 = arith.mulf %18, %17 : vector<8x128xf32>
    %20 = arith.maximumf %17, %19 : vector<8x128xf32>
    %21 = arith.truncf %20 : vector<8x128xf32> to vector<8x128xbf16>
    %c256 = arith.constant 256 : index
    %c0_12 = arith.constant 0 : index
    %22 = vector.load %arg2[%c256, %c0_12] : memref<640x128xbf16, #tpu.memory_space<vmem>>, vector<128x128xbf16>
    %cst_13 = arith.constant dense<0.000000e+00> : vector<8x128xf32>
    %23 = tpu.matmul %21, %22, %cst_13 {dimension_numbers = #tpu.dot_dimension_numbers<[1], [0], [0], [1], [0, 0, 1, 1], [], []>} : vector<8x128xbf16>, vector<128x128xbf16>, vector<8x128xf32> -> vector<8x128xf32>
    %c2 = arith.constant 2 : index
    %c0_14 = arith.constant 0 : index
    %c0_15 = arith.constant 0 : index
    %24 = vector.load %arg3[%c2, %c0_14, %c0_15] : memref<5x1x128xf32, #tpu.memory_space<vmem>>, vector<1x1x128xf32>
    %25 = vector.shape_cast %24 : vector<1x1x128xf32> to vector<1x128xf32>
    %26 = vector.broadcast %25 : vector<1x128xf32> to vector<8x128xf32>
    %27 = arith.addf %23, %26 : vector<8x128xf32>
    %cst_16 = arith.constant 0.00999999977 : f32
    %28 = vector.broadcast %cst_16 : f32 to vector<8x128xf32>
    %29 = arith.mulf %28, %27 : vector<8x128xf32>
    %30 = arith.maximumf %27, %29 : vector<8x128xf32>
    %31 = arith.truncf %30 : vector<8x128xf32> to vector<8x128xbf16>
    %c384 = arith.constant 384 : index
    %c0_17 = arith.constant 0 : index
    %32 = vector.load %arg2[%c384, %c0_17] : memref<640x128xbf16, #tpu.memory_space<vmem>>, vector<128x128xbf16>
    %cst_18 = arith.constant dense<0.000000e+00> : vector<8x128xf32>
    %33 = tpu.matmul %31, %32, %cst_18 {dimension_numbers = #tpu.dot_dimension_numbers<[1], [0], [0], [1], [0, 0, 1, 1], [], []>} : vector<8x128xbf16>, vector<128x128xbf16>, vector<8x128xf32> -> vector<8x128xf32>
    %c3 = arith.constant 3 : index
    %c0_19 = arith.constant 0 : index
    %c0_20 = arith.constant 0 : index
    %34 = vector.load %arg3[%c3, %c0_19, %c0_20] : memref<5x1x128xf32, #tpu.memory_space<vmem>>, vector<1x1x128xf32>
    %35 = vector.shape_cast %34 : vector<1x1x128xf32> to vector<1x128xf32>
    %36 = vector.broadcast %35 : vector<1x128xf32> to vector<8x128xf32>
    %37 = arith.addf %33, %36 : vector<8x128xf32>
    %cst_21 = arith.constant 0.00999999977 : f32
    %38 = vector.broadcast %cst_21 : f32 to vector<8x128xf32>
    %39 = arith.mulf %38, %37 : vector<8x128xf32>
    %40 = arith.maximumf %37, %39 : vector<8x128xf32>
    %41 = arith.truncf %40 : vector<8x128xf32> to vector<8x128xbf16>
    %c512 = arith.constant 512 : index
    %c0_22 = arith.constant 0 : index
    %42 = vector.load %arg2[%c512, %c0_22] : memref<640x128xbf16, #tpu.memory_space<vmem>>, vector<128x128xbf16>
    %cst_23 = arith.constant dense<0.000000e+00> : vector<8x128xf32>
    %43 = tpu.matmul %41, %42, %cst_23 {dimension_numbers = #tpu.dot_dimension_numbers<[1], [0], [0], [1], [0, 0, 1, 1], [], []>} : vector<8x128xbf16>, vector<128x128xbf16>, vector<8x128xf32> -> vector<8x128xf32>
    %c4 = arith.constant 4 : index
    %c0_24 = arith.constant 0 : index
    %c0_25 = arith.constant 0 : index
    %44 = vector.load %arg3[%c4, %c0_24, %c0_25] : memref<5x1x128xf32, #tpu.memory_space<vmem>>, vector<1x1x128xf32>
    %45 = vector.shape_cast %44 : vector<1x1x128xf32> to vector<1x128xf32>
    %46 = vector.broadcast %45 : vector<1x128xf32> to vector<8x128xf32>
    %47 = arith.addf %43, %46 : vector<8x128xf32>
    %cst_26 = arith.constant 0.00999999977 : f32
    %48 = vector.broadcast %cst_26 : f32 to vector<8x128xf32>
    %49 = arith.mulf %48, %47 : vector<8x128xf32>
    %50 = arith.maximumf %47, %49 : vector<8x128xf32>
    %51 = vector.extract_strided_slice %50 {offsets = [0, 0], sizes = [8, 1], strides = [1, 1]} : vector<8x128xf32> to vector<8x1xf32>
    %c0_27 = arith.constant 0 : index
    %c0_28 = arith.constant 0 : index
    %52 = vector.load %arg4[%c0_27, %c0_28] : memref<8x1xf32, #tpu.memory_space<vmem>>, vector<8x1xf32>
    tpu.vector_store %arg4[%c0_27, %c0_28], %51 {strides = array<i32>} : memref<8x1xf32, #tpu.memory_space<vmem>>, vector<8x1xf32>,
    return
  }
  func.func @transform_0(%arg0: i32) -> (i32, i32) {
    %c0_i32 = arith.constant 0 : i32
    %c0_i32_0 = arith.constant 0 : i32
    return %arg0, %c0_i32 : i32, i32
  }
  func.func @transform_1(%arg0: i32) -> (i32, i32) {
    %c0_i32 = arith.constant 0 : i32
    %c0_i32_0 = arith.constant 0 : i32
    %c0_i32_1 = arith.constant 0 : i32
    return %c0_i32, %c0_i32_0 : i32, i32
  }
  func.func @transform_2(%arg0: i32) -> (i32, i32, i32) {
    %c0_i32 = arith.constant 0 : i32
    %c0_i32_0 = arith.constant 0 : i32
    %c0_i32_1 = arith.constant 0 : i32
    %c0_i32_2 = arith.constant 0 : i32
    return %c0_i32, %c0_i32_0, %c0_i32_1 : i32, i32, i32
  }
  func.func @transform_3(%arg0: i32) -> (i32, i32) {
    %c0_i32 = arith.constant 0 : i32
    %c0_i32_0 = arith.constant 0 : i32
    return %arg0, %c0_i32 : i32, i32
  }
}

</mosaic_0001>

<llo_original>
// kernel: tpu_custom_call.1
$region0: #{tpu_custom_call.1}
  #allocation0 [shape = 'u32[]', space=smem, size = 0x4, offset = 0x4, fixed_abs, tag = 'smem constant byte address 0x4 - core index']
  #allocation1 [shape = 'u32[144,128]{1,0:T(1,128)}', space=vmem, size = 0x12000, scoped, tag = 'internal scratch']
  %s0 = inlined_call_operand.hbm [shape: f32[8,32], index: 0, kind: input, shape index: {}]
  %s1 = inlined_call_operand.hbm [shape: bf16[640,128], index: 1, kind: input, shape index: {}]
  %s2 = inlined_call_operand.vmem [shape: f32[5,1,128], index: 2, kind: input, shape index: {}]
  %s3 = inlined_call_operand.vmem [shape: f32[8,1], index: 3, kind: output, shape index: {}]
  %s4 = sld [smem:[#allocation0]]
  $region30: #{tpu_custom_call.1} parent=0
    _
  %s6 = ssub.s32 1, %s4
  %s7 = scalar_select 0, %s6, %s4
  $region1: #{tpu_custom_call.1} parent=0
    #allocation2 [shape = 'u8[4096]{0}', space=vmem, size = 0x1000, scoped, tag = 'input window, operand 0, single buffered']
    #allocation3 [shape = 's32[1]{0}', space=sflag, size = 0x4, scoped, tag = 'scoped memory for tpu_custom_call.1']
    #allocation4 [shape = 'u8[163840]{0}', space=vmem, size = 0x28000, scoped, tag = 'input window, operand 1, single buffered']
    #allocation5 [shape = 's32[1]{0}', space=sflag, size = 0x4, scoped, tag = 'scoped memory for tpu_custom_call.1']
    %8 = vsyncpa [#allocation3], 0
    %9 = vsyncpa [#allocation5], 0
    // Predicated region
    $region2: #{tpu_custom_call.1} parent=1 // pred_check
      _
    $region3: #{tpu_custom_call.1} parent=1 // pred_check_branch
      %11 = sbr.rel (0) target = $region5
    $region4: #{tpu_custom_call.1} parent=1 // pred_region
      %s13 = ssub.s32 128, 128
      %14 = vsyncadd [#allocation3], %s13
      %s16 = sshll.u32 [#allocation2], 4
      %s17 = int_to_ptr.vmem [resolvable:$true] %s16
      %19 = dma.hbm_to_vmem [thread:$0]  %s0, 128, %s17, [#allocation3]
    $region5: #{tpu_custom_call.1} parent=1 // pred_fallthru
      _
    // Predicated region
    $region6: #{tpu_custom_call.1} parent=1 // pred_check
      _
    $region7: #{tpu_custom_call.1} parent=1 // pred_check_branch
      %21 = sbr.rel (0) target = $region9
    $region8: #{tpu_custom_call.1} parent=1 // pred_region
      %s23 = ssub.s32 5120, 5120
      %24 = vsyncadd [#allocation5], %s23
      %s25 = sshll.u32 [#allocation4], 4
      %s26 = int_to_ptr.vmem [resolvable:$true] %s25
      %31 = dma.hbm_to_vmem [thread:$0]  %s1, 5120, %s26, [#allocation5], 64, 64, 4
    $region9: #{tpu_custom_call.1} parent=1 // pred_fallthru
      _
    // Predicated region
    $region10: #{tpu_custom_call.1} parent=1 // pred_check
      _
    $region11: #{tpu_custom_call.1} parent=1 // pred_check_branch
      %33 = sbr.rel (0) target = $region13
    $region12: #{tpu_custom_call.1} parent=1 // pred_region
      _
    $region13: #{tpu_custom_call.1} parent=1 // pred_fallthru
      _
    // Predicated region
    $region14: #{tpu_custom_call.1} parent=1 // pred_check
      _
    $region15: #{tpu_custom_call.1} parent=1 // pred_check_branch
      %35 = sbr.rel (0) target = $region17
    $region16: #{tpu_custom_call.1} parent=1 // pred_region
      %36 = dma.done [#allocation3], 128
    $region17: #{tpu_custom_call.1} parent=1 // pred_fallthru
      _
    // Predicated region
    $region18: #{tpu_custom_call.1} parent=1 // pred_check
      _
    $region19: #{tpu_custom_call.1} parent=1 // pred_check_branch
      %38 = sbr.rel (0) target = $region21
    $region20: #{tpu_custom_call.1} parent=1 // pred_region
      %39 = dma.done [#allocation5], 5120
    $region21: #{tpu_custom_call.1} parent=1 // pred_fallthru
      _
    %v41 = vld [vmem:[#allocation2] sm:$0xff]
    %v42 = vpack.c.bf16 %v41, %v41
    %v43 = vld [vmem:[#allocation4] sm:$0xf]
    %v44 = vld [vmem:[#allocation4 + $0x4] sm:$0xf]
    %v45 = vld [vmem:[#allocation4 + $0x8] sm:$0xf]
    %v46 = vld [vmem:[#allocation4 + $0xc] sm:$0xf]
    %v47 = vld [vmem:[%s2] sm:$0x1]
    %v49 = vlaneseq
    %v50 = vshrl.u32 %v49, 7
    %v51 = vsub.s32 0, %v50
    %v52 = vrot.slane %v47, %v51
    %v58 = vunpack.c.l.b16 %v43
    %v59 = vunpack.c.l.b16 %v44
    %v60 = vunpack.c.l.b16 %v45
    %v61 = vunpack.c.l.b16 %v46
    %v62 = vpack.c.b16 %v59, %v58
    %v63 = vpack.c.b16 %v61, %v60
    %vm66 = vcmask 261120
    %v68 = vsel %vm66, %v42, 0
    %70 = vmatprep.subr.bf16.mxu0 0
    %71 = vmatpush1.bf16.msra.mxu0 %v62
    %72 = vmatprep.subr.bf16.mxu0 0
    %73 = vmatpush1.bf16.msra.mxu0 %v63
    %74 = vmatprep.subr.bf16.mxu0 0
    %75 = vmatpush1.bf16.msra.mxu0 0
    %76 = vmatprep.subr.bf16.mxu0 0
    %77 = vmatpush1.bf16.msra.mxu0 0
    %78 = vmatprep.subr.bf16.mxu0 0
    %79 = vmatpush1.bf16.msra.mxu0 0
    %80 = vmatprep.subr.bf16.mxu0 0
    %81 = vmatpush1.bf16.msra.mxu0 0
    %82 = vmatprep.subr.bf16.mxu0 0
    %83 = vmatpush1.bf16.msra.mxu0 0
    %84 = vmatprep.subr.bf16.mxu0 0
    %85 = vmatpush1.bf16.msra.mxu0 0
    %86 = vmatprep.subr.bf16.mxu0 0
    %87 = vmatpush1.bf16.msra.mxu0 0
    %88 = vmatprep.subr.bf16.mxu0 0
    %89 = vmatpush1.bf16.msra.mxu0 0
    %90 = vmatprep.subr.bf16.mxu0 0
    %91 = vmatpush1.bf16.msra.mxu0 0
    %92 = vmatprep.subr.bf16.mxu0 0
    %93 = vmatpush1.bf16.msra.mxu0 0
    %94 = vmatprep.subr.bf16.mxu0 0
    %95 = vmatpush1.bf16.msra.mxu0 0
    %96 = vmatprep.subr.bf16.mxu0 0
    %97 = vmatpush1.bf16.msra.mxu0 0
    %98 = vmatprep.subr.bf16.mxu0 0
    %99 = vmatpush1.bf16.msra.mxu0 0
    %100 = vmatprep.subr.bf16.mxu0 0
    %101 = vmatpush1.bf16.msra.mxu0 0
    %102 = vmatprep.mubr.bf16.mxu0 0
    %103 = vmatmul.mubr.bf16.gmra.mrb[0].mxu0 %v68
    %v104 = vpop.f32.mrb[0].mxu0
    %v105 = vadd.f32 %v52, %v104
    %v106 = vpop.f32.mrb[0].mxu0
    %v107 = vpop.f32.mrb[0].mxu0
    %v108 = vpop.f32.mrb[0].mxu0
    %109 = vdwg.mxu0
    %v110 = vmul.f32 %v105, 0.01
    %v111 = vmax.f32 %v105, %v110
    %v112 = vpack.c.bf16 %v111, %v111
    %v113 = vld [vmem:[#allocation4 + $0x40] sm:$0xf]
    %v114 = vld [vmem:[#allocation4 + $0x44] sm:$0xf]
    %v115 = vld [vmem:[#allocation4 + $0x48] sm:$0xf]
    %v116 = vld [vmem:[#allocation4 + $0x4c] sm:$0xf]
    %v117 = vld [vmem:[#allocation4 + $0x50] sm:$0xf]
    %v118 = vld [vmem:[#allocation4 + $0x54] sm:$0xf]
    %v119 = vld [vmem:[#allocation4 + $0x58] sm:$0xf]
    %v120 = vld [vmem:[#allocation4 + $0x5c] sm:$0xf]
    %v121 = vld [vmem:[#allocation4 + $0x60] sm:$0xf]
    %v122 = vld [vmem:[#allocation4 + $0x64] sm:$0xf]
    %v123 = vld [vmem:[#allocation4 + $0x68] sm:$0xf]
    %v124 = vld [vmem:[#allocation4 + $0x6c] sm:$0xf]
    %v125 = vld [vmem:[#allocation4 + $0x70] sm:$0xf]
    %v126 = vld [vmem:[#allocation4 + $0x74] sm:$0xf]
    %v127 = vld [vmem:[#allocation4 + $0x78] sm:$0xf]
    %v128 = vld [vmem:[#allocation4 + $0x7c] sm:$0xf]
    %s129 = scalar_lea.vmem %s2, 1
    %v130 = vld [vmem:[%s129] sm:$0x1]
    %v132 = vlaneseq
    %v133 = vshrl.u32 %v132, 7
    %v134 = vsub.s32 0, %v133
    %v135 = vrot.slane %v130, %v134
    %v153 = vunpack.c.l.b16 %v113
    %v154 = vunpack.c.l.b16 %v114
    %v155 = vunpack.c.l.b16 %v115
    %v156 = vunpack.c.l.b16 %v116
    %v157 = vunpack.c.l.b16 %v117
    %v158 = vunpack.c.l.b16 %v118
    %v159 = vunpack.c.l.b16 %v119
    %v160 = vunpack.c.l.b16 %v120
    %v161 = vunpack.c.l.b16 %v121
    %v162 = vunpack.c.l.b16 %v122
    %v163 = vunpack.c.l.b16 %v123
    %v164 = vunpack.c.l.b16 %v124
    %v165 = vunpack.c.l.b16 %v125
    %v166 = vunpack.c.l.b16 %v126
    %v167 = vunpack.c.l.b16 %v127
    %v168 = vunpack.c.l.b16 %v128
    %v169 = vpack.c.b16 %v154, %v153
    %v170 = vpack.c.b16 %v156, %v155
    %v171 = vpack.c.b16 %v158, %v157
    %v172 = vpack.c.b16 %v160, %v159
    %v173 = vpack.c.b16 %v162, %v161
    %v174 = vpack.c.b16 %v164, %v163
    %v175 = vpack.c.b16 %v166, %v165
    %v176 = vpack.c.b16 %v168, %v167
    %185 = vmatprep.subr.bf16.mxu0 0
    %186 = vmatpush1.bf16.msra.mxu0 %v169
    %187 = vmatprep.subr.bf16.mxu0 0
    %188 = vmatpush1.bf16.msra.mxu0 %v170
    %189 = vmatprep.subr.bf16.mxu0 0
    %190 = vmatpush1.bf16.msra.mxu0 %v171
    %191 = vmatprep.subr.bf16.mxu0 0
    %192 = vmatpush1.bf16.msra.mxu0 %v172
    %193 = vmatprep.subr.bf16.mxu0 0
    %194 = vmatpush1.bf16.msra.mxu0 %v173
    %195 = vmatprep.subr.bf16.mxu0 0
    %196 = vmatpush1.bf16.msra.mxu0 %v174
    %197 = vmatprep.subr.bf16.mxu0 0
    %198 = vmatpush1.bf16.msra.mxu0 %v175
    %199 = vmatprep.subr.bf16.mxu0 0
    %200 = vmatpush1.bf16.msra.mxu0 %v176
    %201 = vmatprep.subr.bf16.mxu0 0
    %202 = vmatpush1.bf16.msra.mxu0 0
    %203 = vmatprep.subr.bf16.mxu0 0
    %204 = vmatpush1.bf16.msra.mxu0 0
    %205 = vmatprep.subr.bf16.mxu0 0
    %206 = vmatpush1.bf16.msra.mxu0 0
    %207 = vmatprep.subr.bf16.mxu0 0
    %208 = vmatpush1.bf16.msra.mxu0 0
    %209 = vmatprep.subr.bf16.mxu0 0
    %210 = vmatpush1.bf16.msra.mxu0 0
    %211 = vmatprep.subr.bf16.mxu0 0
    %212 = vmatpush1.bf16.msra.mxu0 0
    %213 = vmatprep.subr.bf16.mxu0 0
    %214 = vmatpush1.bf16.msra.mxu0 0
    %215 = vmatprep.subr.bf16.mxu0 0
    %216 = vmatpush1.bf16.msra.mxu0 0
    %217 = vmatprep.mubr.bf16.mxu0 0
    %218 = vmatmul.mubr.bf16.gmra.mrb[0].mxu0 %v112
    %v219 = vpop.f32.mrb[0].mxu0
    %v220 = vadd.f32 %v135, %v219
    %v221 = vpop.f32.mrb[0].mxu0
    %v222 = vpop.f32.mrb[0].mxu0
    %v223 = vpop.f32.mrb[0].mxu0
    %224 = vdwg.mxu0
    %v225 = vmul.f32 %v220, 0.01
    %v226 = vmax.f32 %v220, %v225
    %v227 = vpack.c.bf16 %v226, %v226
    %v228 = vld [vmem:[#allocation4 + $0x80] sm:$0xf]
    %v229 = vld [vmem:[#allocation4 + $0x84] sm:$0xf]
    %v230 = vld [vmem:[#allocation4 + $0x88] sm:$0xf]
    %v231 = vld [vmem:[#allocation4 + $0x8c] sm:$0xf]
    %v232 = vld [vmem:[#allocation4 + $0x90] sm:$0xf]
    %v233 = vld [vmem:[#allocation4 + $0x94] sm:$0xf]
    %v234 = vld [vmem:[#allocation4 + $0x98] sm:$0xf]
    %v235 = vld [vmem:[#allocation4 + $0x9c] sm:$0xf]
    %v236 = vld [vmem:[#allocation4 + $0xa0] sm:$0xf]
    %v237 = vld [vmem:[#allocation4 + $0xa4] sm:$0xf]
    %v238 = vld [vmem:[#allocation4 + $0xa8] sm:$0xf]
    %v239 = vld [vmem:[#allocation4 + $0xac] sm:$0xf]
    %v240 = vld [vmem:[#allocation4 + $0xb0] sm:$0xf]
    %v241 = vld [vmem:[#allocation4 + $0xb4] sm:$0xf]
    %v242 = vld [vmem:[#allocation4 + $0xb8] sm:$0xf]
    %v243 = vld [vmem:[#allocation4 + $0xbc] sm:$0xf]
    %s244 = scalar_lea.vmem %s2, 2
    %v245 = vld [vmem:[%s244] sm:$0x1]
    %v247 = vlaneseq
    %v248 = vshrl.u32 %v247, 7
    %v249 = vsub.s32 0, %v248
    %v250 = vrot.slane %v245, %v249
    %v268 = vunpack.c.l.b16 %v228
    %v269 = vunpack.c.l.b16 %v229
    %v270 = vunpack.c.l.b16 %v230
    %v271 = vunpack.c.l.b16 %v231
    %v272 = vunpack.c.l.b16 %v232
    %v273 = vunpack.c.l.b16 %v233
    %v274 = vunpack.c.l.b16 %v234
    %v275 = vunpack.c.l.b16 %v235
    %v276 = vunpack.c.l.b16 %v236
    %v277 = vunpack.c.l.b16 %v237
    %v278 = vunpack.c.l.b16 %v238
    %v279 = vunpack.c.l.b16 %v239
    %v280 = vunpack.c.l.b16 %v240
    %v281 = vunpack.c.l.b16 %v241
    %v282 = vunpack.c.l.b16 %v242
    %v283 = vunpack.c.l.b16 %v243
    %v284 = vpack.c.b16 %v269, %v268
    %v285 = vpack.c.b16 %v271, %v270
    %v286 = vpack.c.b16 %v273, %v272
    %v287 = vpack.c.b16 %v275, %v274
    %v288 = vpack.c.b16 %v277, %v276
    %v289 = vpack.c.b16 %v279, %v278
    %v290 = vpack.c.b16 %v281, %v280
    %v291 = vpack.c.b16 %v283, %v282
    %300 = vmatprep.subr.bf16.mxu0 0
    %301 = vmatpush1.bf16.msra.mxu0 %v284
    %302 = vmatprep.subr.bf16.mxu0 0
    %303 = vmatpush1.bf16.msra.mxu0 %v285
    %304 = vmatprep.subr.bf16.mxu0 0
    %305 = vmatpush1.bf16.msra.mxu0 %v286
    %306 = vmatprep.subr.bf16.mxu0 0
    %307 = vmatpush1.bf16.msra.mxu0 %v287
    %308 = vmatprep.subr.bf16.mxu0 0
    %309 = vmatpush1.bf16.msra.mxu0 %v288
    %310 = vmatprep.subr.bf16.mxu0 0
    %311 = vmatpush1.bf16.msra.mxu0 %v289
    %312 = vmatprep.subr.bf16.mxu0 0
    %313 = vmatpush1.bf16.msra.mxu0 %v290
    %314 = vmatprep.subr.bf16.mxu0 0
    %315 = vmatpush1.bf16.msra.mxu0 %v291
    %316 = vmatprep.subr.bf16.mxu0 0
    %317 = vmatpush1.bf16.msra.mxu0 0
    %318 = vmatprep.subr.bf16.mxu0 0
    %319 = vmatpush1.bf16.msra.mxu0 0
    %320 = vmatprep.subr.bf16.mxu0 0
    %321 = vmatpush1.bf16.msra.mxu0 0
    %322 = vmatprep.subr.bf16.mxu0 0
    %323 = vmatpush1.bf16.msra.mxu0 0
    %324 = vmatprep.subr.bf16.mxu0 0
    %325 = vmatpush1.bf16.msra.mxu0 0
    %326 = vmatprep.subr.bf16.mxu0 0
    %327 = vmatpush1.bf16.msra.mxu0 0
    %328 = vmatprep.subr.bf16.mxu0 0
    %329 = vmatpush1.bf16.msra.mxu0 0
    %330 = vmatprep.subr.bf16.mxu0 0
    %331 = vmatpush1.bf16.msra.mxu0 0
    %332 = vmatprep.mubr.bf16.mxu0 0
    %333 = vmatmul.mubr.bf16.gmra.mrb[0].mxu0 %v227
    %v334 = vpop.f32.mrb[0].mxu0
    %v335 = vadd.f32 %v250, %v334
    %v336 = vpop.f32.mrb[0].mxu0
    %v337 = vpop.f32.mrb[0].mxu0
    %v338 = vpop.f32.mrb[0].mxu0
    %339 = vdwg.mxu0
    %v340 = vmul.f32 %v335, 0.01
    %v341 = vmax.f32 %v335, %v340
    %v342 = vpack.c.bf16 %v341, %v341
    %v343 = vld [vmem:[#allocation4 + $0xc0] sm:$0xf]
    %v344 = vld [vmem:[#allocation4 + $0xc4] sm:$0xf]
    %v345 = vld [vmem:[#allocation4 + $0xc8] sm:$0xf]
    %v346 = vld [vmem:[#allocation4 + $0xcc] sm:$0xf]
    %v347 = vld [vmem:[#allocation4 + $0xd0] sm:$0xf]
    %v348 = vld [vmem:[#allocation4 + $0xd4] sm:$0xf]
    %v349 = vld [vmem:[#allocation4 + $0xd8] sm:$0xf]
    %v350 = vld [vmem:[#allocation4 + $0xdc] sm:$0xf]
    %v351 = vld [vmem:[#allocation4 + $0xe0] sm:$0xf]
    %v352 = vld [vmem:[#allocation4 + $0xe4] sm:$0xf]
    %v353 = vld [vmem:[#allocation4 + $0xe8] sm:$0xf]
    %v354 = vld [vmem:[#allocation4 + $0xec] sm:$0xf]
    %v355 = vld [vmem:[#allocation4 + $0xf0] sm:$0xf]
    %v356 = vld [vmem:[#allocation4 + $0xf4] sm:$0xf]
    %v357 = vld [vmem:[#allocation4 + $0xf8] sm:$0xf]
    %v358 = vld [vmem:[#allocation4 + $0xfc] sm:$0xf]
    %s359 = scalar_lea.vmem %s2, 3
    %v360 = vld [vmem:[%s359] sm:$0x1]
    %v362 = vlaneseq
    %v363 = vshrl.u32 %v362, 7
    %v364 = vsub.s32 0, %v363
    %v365 = vrot.slane %v360, %v364
    %v383 = vunpack.c.l.b16 %v343
    %v384 = vunpack.c.l.b16 %v344
    %v385 = vunpack.c.l.b16 %v345
    %v386 = vunpack.c.l.b16 %v346
    %v387 = vunpack.c.l.b16 %v347
    %v388 = vunpack.c.l.b16 %v348
    %v389 = vunpack.c.l.b16 %v349
    %v390 = vunpack.c.l.b16 %v350
    %v391 = vunpack.c.l.b16 %v351
    %v392 = vunpack.c.l.b16 %v352
    %v393 = vunpack.c.l.b16 %v353
    %v394 = vunpack.c.l.b16 %v354
    %v395 = vunpack.c.l.b16 %v355
    %v396 = vunpack.c.l.b16 %v356
    %v397 = vunpack.c.l.b16 %v357
    %v398 = vunpack.c.l.b16 %v358
    %v399 = vpack.c.b16 %v384, %v383
    %v400 = vpack.c.b16 %v386, %v385
    %v401 = vpack.c.b16 %v388, %v387
    %v402 = vpack.c.b16 %v390, %v389
    %v403 = vpack.c.b16 %v392, %v391
    %v404 = vpack.c.b16 %v394, %v393
    %v405 = vpack.c.b16 %v396, %v395
    %v406 = vpack.c.b16 %v398, %v397
    %415 = vmatprep.subr.bf16.mxu0 0
    %416 = vmatpush1.bf16.msra.mxu0 %v399
    %417 = vmatprep.subr.bf16.mxu0 0
    %418 = vmatpush1.bf16.msra.mxu0 %v400
    %419 = vmatprep.subr.bf16.mxu0 0
    %420 = vmatpush1.bf16.msra.mxu0 %v401
    %421 = vmatprep.subr.bf16.mxu0 0
    %422 = vmatpush1.bf16.msra.mxu0 %v402
    %423 = vmatprep.subr.bf16.mxu0 0
    %424 = vmatpush1.bf16.msra.mxu0 %v403
    %425 = vmatprep.subr.bf16.mxu0 0
    %426 = vmatpush1.bf16.msra.mxu0 %v404
    %427 = vmatprep.subr.bf16.mxu0 0
    %428 = vmatpush1.bf16.msra.mxu0 %v405
    %429 = vmatprep.subr.bf16.mxu0 0
    %430 = vmatpush1.bf16.msra.mxu0 %v406
    %431 = vmatprep.subr.bf16.mxu0 0
    %432 = vmatpush1.bf16.msra.mxu0 0
    %433 = vmatprep.subr.bf16.mxu0 0
    %434 = vmatpush1.bf16.msra.mxu0 0
    %435 = vmatprep.subr.bf16.mxu0 0
    %436 = vmatpush1.bf16.msra.mxu0 0
    %437 = vmatprep.subr.bf16.mxu0 0
    %438 = vmatpush1.bf16.msra.mxu0 0
    %439 = vmatprep.subr.bf16.mxu0 0
    %440 = vmatpush1.bf16.msra.mxu0 0
    %441 = vmatprep.subr.bf16.mxu0 0
    %442 = vmatpush1.bf16.msra.mxu0 0
    %443 = vmatprep.subr.bf16.mxu0 0
    %444 = vmatpush1.bf16.msra.mxu0 0
    %445 = vmatprep.subr.bf16.mxu0 0
    %446 = vmatpush1.bf16.msra.mxu0 0
    %447 = vmatprep.mubr.bf16.mxu0 0
    %448 = vmatmul.mubr.bf16.gmra.mrb[0].mxu0 %v342
    %v449 = vpop.f32.mrb[0].mxu0
    %v450 = vadd.f32 %v365, %v449
    %v451 = vpop.f32.mrb[0].mxu0
    %v452 = vpop.f32.mrb[0].mxu0
    %v453 = vpop.f32.mrb[0].mxu0
    %454 = vdwg.mxu0
    %v455 = vmul.f32 %v450, 0.01
    %v456 = vmax.f32 %v450, %v455
    %v457 = vpack.c.bf16 %v456, %v456
    %v458 = vld [vmem:[#allocation4 + $0x100] sm:$0xf]
    %v459 = vld [vmem:[#allocation4 + $0x104] sm:$0xf]
    %v460 = vld [vmem:[#allocation4 + $0x108] sm:$0xf]
    %v461 = vld [vmem:[#allocation4 + $0x10c] sm:$0xf]
    %v462 = vld [vmem:[#allocation4 + $0x110] sm:$0xf]
    %v463 = vld [vmem:[#allocation4 + $0x114] sm:$0xf]
    %v464 = vld [vmem:[#allocation4 + $0x118] sm:$0xf]
    %v465 = vld [vmem:[#allocation4 + $0x11c] sm:$0xf]
    %v466 = vld [vmem:[#allocation4 + $0x120] sm:$0xf]
    %v467 = vld [vmem:[#allocation4 + $0x124] sm:$0xf]
    %v468 = vld [vmem:[#allocation4 + $0x128] sm:$0xf]
    %v469 = vld [vmem:[#allocation4 + $0x12c] sm:$0xf]
    %v470 = vld [vmem:[#allocation4 + $0x130] sm:$0xf]
    %v471 = vld [vmem:[#allocation4 + $0x134] sm:$0xf]
    %v472 = vld [vmem:[#allocation4 + $0x138] sm:$0xf]
    %v473 = vld [vmem:[#allocation4 + $0x13c] sm:$0xf]
    %s474 = scalar_lea.vmem %s2, 4
    %v475 = vld [vmem:[%s474] sm:$0x1]
    %v477 = vlaneseq
    %v478 = vshrl.u32 %v477, 7
    %v479 = vsub.s32 0, %v478
    %v480 = vrot.slane %v475, %v479
    %v498 = vunpack.c.l.b16 %v458
    %v499 = vunpack.c.l.b16 %v459
    %v500 = vunpack.c.l.b16 %v460
    %v501 = vunpack.c.l.b16 %v461
    %v502 = vunpack.c.l.b16 %v462
    %v503 = vunpack.c.l.b16 %v463
    %v504 = vunpack.c.l.b16 %v464
    %v505 = vunpack.c.l.b16 %v465
    %v506 = vunpack.c.l.b16 %v466
    %v507 = vunpack.c.l.b16 %v467
    %v508 = vunpack.c.l.b16 %v468
    %v509 = vunpack.c.l.b16 %v469
    %v510 = vunpack.c.l.b16 %v470
    %v511 = vunpack.c.l.b16 %v471
    %v512 = vunpack.c.l.b16 %v472
    %v513 = vunpack.c.l.b16 %v473
    %v514 = vpack.c.b16 %v499, %v498
    %v515 = vpack.c.b16 %v501, %v500
    %v516 = vpack.c.b16 %v503, %v502
    %v517 = vpack.c.b16 %v505, %v504
    %v518 = vpack.c.b16 %v507, %v506
    %v519 = vpack.c.b16 %v509, %v508
    %v520 = vpack.c.b16 %v511, %v510
    %v521 = vpack.c.b16 %v513, %v512
    %530 = vmatprep.subr.bf16.mxu0 0
    %531 = vmatpush1.bf16.msra.mxu0 %v514
    %532 = vmatprep.subr.bf16.mxu0 0
    %533 = vmatpush1.bf16.msra.mxu0 %v515
    %534 = vmatprep.subr.bf16.mxu0 0
    %535 = vmatpush1.bf16.msra.mxu0 %v516
    %536 = vmatprep.subr.bf16.mxu0 0
    %537 = vmatpush1.bf16.msra.mxu0 %v517
    %538 = vmatprep.subr.bf16.mxu0 0
    %539 = vmatpush1.bf16.msra.mxu0 %v518
    %540 = vmatprep.subr.bf16.mxu0 0
    %541 = vmatpush1.bf16.msra.mxu0 %v519
    %542 = vmatprep.subr.bf16.mxu0 0
    %543 = vmatpush1.bf16.msra.mxu0 %v520
    %544 = vmatprep.subr.bf16.mxu0 0
    %545 = vmatpush1.bf16.msra.mxu0 %v521
    %546 = vmatprep.subr.bf16.mxu0 0
    %547 = vmatpush1.bf16.msra.mxu0 0
    %548 = vmatprep.subr.bf16.mxu0 0
    %549 = vmatpush1.bf16.msra.mxu0 0
    %550 = vmatprep.subr.bf16.mxu0 0
    %551 = vmatpush1.bf16.msra.mxu0 0
    %552 = vmatprep.subr.bf16.mxu0 0
    %553 = vmatpush1.bf16.msra.mxu0 0
    %554 = vmatprep.subr.bf16.mxu0 0
    %555 = vmatpush1.bf16.msra.mxu0 0
    %556 = vmatprep.subr.bf16.mxu0 0
    %557 = vmatpush1.bf16.msra.mxu0 0
    %558 = vmatprep.subr.bf16.mxu0 0
    %559 = vmatpush1.bf16.msra.mxu0 0
    %560 = vmatprep.subr.bf16.mxu0 0
    %561 = vmatpush1.bf16.msra.mxu0 0
    %562 = vmatprep.mubr.bf16.mxu0 0
    %563 = vmatmul.mubr.bf16.gmra.mrb[0].mxu0 %v457
    %v564 = vpop.f32.mrb[0].mxu0
    %v565 = vadd.f32 %v480, %v564
    %v566 = vpop.f32.mrb[0].mxu0
    %v567 = vpop.f32.mrb[0].mxu0
    %v568 = vpop.f32.mrb[0].mxu0
    %569 = vdwg.mxu0
    %v570 = vmul.f32 %v565, 0.01
    %v571 = vmax.f32 %v565, %v570
    %vm572 = vcmask 7168
    %573 = vst.msk [vmem:[%s3] sm:$0xff] %vm572, %v571
    // Predicated region
    $region22: #{tpu_custom_call.1} parent=1 // pred_check
      _
    $region23: #{tpu_custom_call.1} parent=1 // pred_check_branch
      %575 = sbr.rel (0) target = $region25
    $region24: #{tpu_custom_call.1} parent=1 // pred_region
      _
    $region25: #{tpu_custom_call.1} parent=1 // pred_fallthru
      _
    // Predicated region
    $region26: #{tpu_custom_call.1} parent=1 // pred_check
      _
    $region27: #{tpu_custom_call.1} parent=1 // pred_check_branch
      %577 = sbr.rel (0) target = $region29
    $region28: #{tpu_custom_call.1} parent=1 // pred_region
      _
    $region29: #{tpu_custom_call.1} parent=1 // pred_fallthru
      _
    %578 = vsyncpa [#allocation3], 1
    %579 = vsyncpa [#allocation5], 1

</llo_original>
